<compile_context>
chip_gen: v5e
topology: v5e:2x2
jax: 0.10.0
libtpu: 0.0.40
codegen_flags: <defaults>
</compile_context>

<pallas_src>
import math
import numpy as np
import jax
import jax.numpy as jnp
from jax.experimental import pallas as pl
from jax.experimental.pallas import tpu as pltpu


# ----------------------------------------------------------------------------
# Pallas kernel: whole forward_current, fully batched, one VMEM block.
# ----------------------------------------------------------------------------
def _coground_kernel(
    # inputs
    u_prev_ref,    # (B, E)
    all_u_ref,     # (B, A, E)
    h0_ref,        # (B, H)
    c0_ref,        # (B, H)
    ctx_ref,       # (B, S, H)
    pe_ref,        # (S, H)
    maskb_ref,     # (B, S) additive mask bias (0 or -1e30)
    wtv_ref,       # (H, H+Vh)   fused [text-attn proj | visual-attn proj]
    wv_ref,        # (E, Vh)     visual MLP Linear, BN1/BN2 folded
    wlstm_ref,     # (2H+2E, 4H) fused [w_ih ; w_hh]
    wact_ref,      # (2H, Vh)    action attention proj
    bias_ref,      # (4, W) packed: [b_text|b_va , b_vis , b_lstm , b_act]
    # outputs
    h1_ref, c1_ref, alpha_text_ref, alpha_action_ref, alpha_vision_ref,
):
    B, E = u_prev_ref.shape
    _, A, _ = all_u_ref.shape
    _, S, H = ctx_ref.shape
    Vh = wv_ref.shape[1]
    f32 = jnp.float32

    # Static slices into the packed bias slab (each row starts at column 0).
    b_tv = bias_ref[0:1, 0:H + Vh]
    b_vis = bias_ref[1:2, 0:Vh]
    b_lstm = bias_ref[2:3, 0:4 * H]
    b_act = bias_ref[3:4, 0:Vh]

    h0 = h0_ref[...]                                                     # (B, H)
    ctx = ctx_ref[...]                                                   # (B, S, H)
    all_u = all_u_ref[...]                                               # (B, A, E)

    # ---- fused h_0 projections for text + visual attention (one MXU push) ----
    target_tv = jnp.dot(h0, wtv_ref[...], preferred_element_type=f32) + b_tv   # (B, H+Vh)
    target_t = target_tv[:, 0:H]                                         # (B, H)
    target_v = target_tv[:, H:H + Vh]                                    # (B, Vh)

    # ---- text attention: WhSoftDot(h_0, k=ctx+pe, v=ctx, mask), batched ----
    ctx_pos = ctx + pe_ref[...][None, :, :]                              # (B, S, H)
    score_t = jnp.sum(ctx_pos * target_t[:, None, :], axis=2)           # (B, S)
    score_t = score_t + maskb_ref[...]                                   # additive -1e30 mask
    m_t = jnp.max(score_t, axis=1, keepdims=True)
    e_t = jnp.exp(score_t - m_t)
    a_t = e_t / jnp.sum(e_t, axis=1, keepdims=True)                      # (B, S)
    alpha_text_ref[...] = a_t                                            # lane-dense store
    attn_text = jnp.sum(a_t[:, :, None] * ctx, axis=1)                   # (B, H)

    # ---- visual MLP (BN folded): ReLU(all_u @ W' + b'), then visual attention ----
    g_flat = jnp.dot(all_u.reshape(B * A, E), wv_ref[...],
                     preferred_element_type=f32) + b_vis
    g_flat = jnp.maximum(g_flat, 0.0)                                    # (B*A, Vh)
    g_v = g_flat.reshape(B, A, Vh)

    score_v = jnp.sum(g_v * target_v[:, None, :], axis=2)                # (B, A)
    m_v = jnp.max(score_v, axis=1, keepdims=True)
    e_v = jnp.exp(score_v - m_v)
    a_v = e_v / jnp.sum(e_v, axis=1, keepdims=True)                      # (B, A)
    alpha_vision_ref[...] = a_v
    attn_vision = jnp.sum(a_v[:, :, None] * all_u, axis=1)               # (B, E)

    # ---- LSTMCell: single fused matmul (B, 2H+2E) @ (2H+2E, 4H) ----
    x = jnp.concatenate([attn_text, attn_vision, u_prev_ref[...], h0], axis=1)
    gates = jnp.dot(x, wlstm_ref[...], preferred_element_type=f32) + b_lstm    # (B, 4H)
    i_g = jax.nn.sigmoid(gates[:, 0:H])
    f_g = jax.nn.sigmoid(gates[:, H:2 * H])
    g_g = jnp.tanh(gates[:, 2 * H:3 * H])
    o_g = jax.nn.sigmoid(gates[:, 3 * H:4 * H])
    c1 = f_g * c0_ref[...] + i_g * g_g
    h1 = o_g * jnp.tanh(c1)
    c1_ref[...] = c1                                                     # whole-block stores
    h1_ref[...] = h1

    # ---- action attention logits (pre-softmax, as in PyTorch) ----
    x_act = jnp.concatenate([attn_text, h1], axis=1)                     # (B, 2H)
    ta = jnp.dot(x_act, wact_ref[...], preferred_element_type=f32) + b_act      # (B, Vh)
    alpha_action_ref[...] = jnp.sum(g_v * ta[:, None, :], axis=2)        # (B, A) raw logits


# ----------------------------------------------------------------------------
# One-time parameter preparation (hoisted out of the per-step decoder call).
# ----------------------------------------------------------------------------
def positional_encoding(seq_len, d_model):
    position = jnp.arange(seq_len, dtype=jnp.float32)[:, None]
    div_term = jnp.exp(
        jnp.arange(0, d_model, 2, dtype=jnp.float32) / d_model * (-math.log(10000.0)))
    ang = position * div_term                                            # (S, d_model//2)
    pe = jnp.stack([jnp.sin(ang), jnp.cos(ang)], axis=-1).reshape(seq_len, d_model)
    return pe


def init_params(key, E, H, Vh):
    ks = jax.random.split(key, 20)
    n = lambda k, shape, s=0.1: jax.random.normal(k, shape, dtype=jnp.float32) * s
    u = lambda k, shape: jax.random.uniform(k, shape, dtype=jnp.float32,
                                            minval=0.5, maxval=1.5)
    return dict(
        w_text=n(ks[0], (H, H)), b_text=n(ks[1], (H,)),
        bn1_gamma=u(ks[2], (E,)), bn1_beta=n(ks[3], (E,)),
        bn1_mean=n(ks[4], (E,)), bn1_var=u(ks[5], (E,)),
        w_vis=n(ks[6], (E, Vh)), b_vis=n(ks[7], (Vh,)),
        bn2_gamma=u(ks[8], (Vh,)), bn2_beta=n(ks[9], (Vh,)),
        bn2_mean=n(ks[10], (Vh,)), bn2_var=u(ks[11], (Vh,)),
        w_va=n(ks[12], (H, Vh)), b_va=n(ks[13], (Vh,)),
        w_ih=n(ks[14], (H + 2 * E, 4 * H)), b_ih=n(ks[15], (4 * H,)),
        w_hh=n(ks[16], (H, 4 * H)), b_hh=n(ks[17], (4 * H,)),
        w_act=n(ks[18], (2 * H, Vh)), b_act=n(ks[19], (Vh,)),
    )


def prepare_params(params, max_len):
    """Fold eval-mode BatchNorms / fuse weights / pack biases. Do ONCE."""
    eps = 1e-5
    H = params["w_text"].shape[0]
    Vh = params["w_va"].shape[1]
    pe = positional_encoding(max_len, H)                                 # (S, H)

    # Fold BN1 (pre-Linear) and BN2 (post-Linear) into the visual Linear.
    bn1_scale = params["bn1_gamma"] / jnp.sqrt(params["bn1_var"] + eps)
    bn1_shift = params["bn1_beta"] - params["bn1_mean"] * bn1_scale
    bn2_scale = params["bn2_gamma"] / jnp.sqrt(params["bn2_var"] + eps)
    bn2_shift = params["bn2_beta"] - params["bn2_mean"] * bn2_scale
    w_vis_f = (bn1_scale[:, None] * params["w_vis"]) * bn2_scale[None, :]
    b_vis_f = (jnp.dot(bn1_shift, params["w_vis"]) + params["b_vis"]) * bn2_scale + bn2_shift

    # Fused h_0 projection: [text-attn proj (H) | visual-attn proj (Vh)].
    w_tv = jnp.concatenate([params["w_text"], params["w_va"]], axis=1)   # (H, H+Vh)
    b_tv = jnp.concatenate([params["b_text"], params["b_va"]], axis=0)   # (H+Vh,)

    # Fused LSTM weight: x = [attn_text(H), attn_vision(E), u_prev(E), h_0(H)].
    w_lstm = jnp.concatenate([params["w_ih"], params["w_hh"]], axis=0)   # (2H+2E, 4H)
    b_lstm = params["b_ih"] + params["b_hh"]

    # Pack all small bias vectors into a single slab (each row starts at column 0).
    biases = [b_tv, b_vis_f, b_lstm, params["b_act"]]
    width = max(int(b.shape[0]) for b in biases)
    bias_slab = jnp.stack([jnp.pad(b, (0, width - int(b.shape[0]))) for b in biases])

    return dict(pe=pe, w_tv=w_tv, w_vis=w_vis_f,
                w_lstm=w_lstm, w_act=params["w_act"], bias_slab=bias_slab)


# ----------------------------------------------------------------------------
# Wrapper: mirrors CogroundDecoderLSTM.forward_current.
# ----------------------------------------------------------------------------
def coground_forward(prepared, u_t_prev, all_u_t, visual_context, h_0, c_0, ctx,
                     ctx_mask=None, history_context=None):
    del visual_context  # panoramic view is DEP / unused by the PyTorch forward
    # TODO(synk): history=True branch needs ContextEncoder (not in reference source).
    assert history_context is None
    B, A, E = all_u_t.shape
    _, S, H = ctx.shape

    # Additive mask (-1e30 ~ -inf; underflows to exactly 0 in the softmax).
    mask_bias = jnp.where(ctx_mask, jnp.float32(-1e30), jnp.float32(0.0))   # (B, S)

    inputs = (u_t_prev, all_u_t, h_0, c_0, ctx, prepared["pe"], mask_bias,
              prepared["w_tv"], prepared["w_vis"],
              prepared["w_lstm"], prepared["w_act"], prepared["bias_slab"])

    out_shape = (
        jax.ShapeDtypeStruct((B, H), jnp.float32),      # h_1
        jax.ShapeDtypeStruct((B, H), jnp.float32),      # c_1
        jax.ShapeDtypeStruct((B, S), jnp.float32),      # alpha_text
        jax.ShapeDtypeStruct((B, A), jnp.float32),      # alpha_action (raw logits)
        jax.ShapeDtypeStruct((B, A), jnp.float32),      # alpha_vision
    )
    vmem = pltpu.MemorySpace.VMEM
    return pl.pallas_call(
        _coground_kernel,
        out_shape=out_shape,
        in_specs=[pl.BlockSpec(memory_space=vmem) for _ in inputs],
        out_specs=tuple(pl.BlockSpec(memory_space=vmem) for _ in out_shape),
        compiler_params=pltpu.CompilerParams(vmem_limit_bytes=32 << 20),
    )(*inputs)


# ----------------------------------------------------------------------------
# Pure-JAX reference (mirrors the PyTorch code path, UNfolded BN) for verification.
# ----------------------------------------------------------------------------
def reference_forward(params, u_t_prev, all_u_t, h_0, c_0, ctx, ctx_mask):
    hi = jax.lax.Precision.HIGHEST
    B, A, E = all_u_t.shape
    _, S, H = ctx.shape
    eps = 1e-5

    ctx_pos = ctx + positional_encoding(S, H)[None]
    tgt = jnp.dot(h_0, params["w_text"], precision=hi) + params["b_text"]
    attn = jnp.einsum("bsh,bh->bs", ctx_pos, tgt, precision=hi)
    attn = jnp.where(ctx_mask, -jnp.inf, attn)
    alpha_text = jax.nn.softmax(attn, axis=1)
    attn_text = jnp.einsum("bs,bsh->bh", alpha_text, ctx, precision=hi)

    g = all_u_t.reshape(B * A, E)
    g = ((g - params["bn1_mean"]) / jnp.sqrt(params["bn1_var"] + eps)
         * params["bn1_gamma"] + params["bn1_beta"])
    g = jnp.dot(g, params["w_vis"], precision=hi) + params["b_vis"]
    g = ((g - params["bn2_mean"]) / jnp.sqrt(params["bn2_var"] + eps)
         * params["bn2_gamma"] + params["bn2_beta"])
    g_v = jnp.maximum(g, 0.0).reshape(B, A, -1)

    tv = jnp.dot(h_0, params["w_va"], precision=hi) + params["b_va"]
    attn_v = jnp.einsum("bav,bv->ba", g_v, tv, precision=hi)
    alpha_vision = jax.nn.softmax(attn_v, axis=1)
    attn_vision = jnp.einsum("ba,bae->be", alpha_vision, all_u_t, precision=hi)

    x = jnp.concatenate([attn_text, attn_vision, u_t_prev], axis=1)
    gates = (jnp.dot(x, params["w_ih"], precision=hi) + params["b_ih"]
             + jnp.dot(h_0, params["w_hh"], precision=hi) + params["b_hh"])
    i, f, gg, o = jnp.split(gates, 4, axis=1)
    c_1 = jax.nn.sigmoid(f) * c_0 + jax.nn.sigmoid(i) * jnp.tanh(gg)
    h_1 = jax.nn.sigmoid(o) * jnp.tanh(c_1)

    act_sel = jnp.concatenate([attn_text, h_1], axis=1)
    ta = jnp.dot(act_sel, params["w_act"], precision=hi) + params["b_act"]
    alpha_action = jnp.einsum("bav,bv->ba", g_v, ta, precision=hi)
    return h_1, c_1, alpha_text, alpha_action, alpha_vision


if __name__ == "__main__":
    B, A, S = 2, 8, 8          # batch, num actions, ctx seq_len
    E = 32                     # embedding_size == feature_size
    H = 32                     # hidden_size
    Vh = 64                    # visual_hidden_size
    V = 4                      # panoramic views (visual_context, unused/DEP)

    key = jax.random.PRNGKey(0)
    kp, k1, k2, k3, k4, k5, k6 = jax.random.split(key, 7)
    params = init_params(kp, E, H, Vh)

    u_t_prev = jax.random.normal(k1, (B, E), dtype=jnp.float32)
    all_u_t = jax.random.normal(k2, (B, A, E), dtype=jnp.float32)
    visual_context = jax.random.normal(k3, (B, V, E), dtype=jnp.float32)   # unused (DEP)
    h_0 = jax.random.normal(k4, (B, H), dtype=jnp.float32)
    c_0 = jax.random.normal(k5, (B, H), dtype=jnp.float32)
    ctx = jax.random.normal(k6, (B, S, H), dtype=jnp.float32)
    ctx_mask = jnp.zeros((B, S), dtype=bool).at[0, S - 2:].set(True)

    # One-time folding (hoisted out of the per-step path), jitted per-step call.
    prepared = prepare_params(params, S)
    fwd = jax.jit(coground_forward)

    outs = fwd(prepared, u_t_prev, all_u_t, visual_context, h_0, c_0, ctx,
               ctx_mask=ctx_mask, history_context=None)
    outs = jax.block_until_ready(outs)

    refs = reference_forward(params, u_t_prev, all_u_t, h_0, c_0, ctx, ctx_mask)
    for name, o, r in zip(["h_1", "c_1", "alpha_text", "alpha_action", "alpha_vision"],
                          outs, refs):
        np.testing.assert_allclose(np.asarray(o), np.asarray(r),
                                   rtol=1e-3, atol=1e-3, err_msg=name)

    print("KERNEL_OK")
</pallas_src>

<mosaic_0001>
module attributes {stable_mosaic.version = 11 : i64} {
  func.func @_coground_kernel(%arg0: memref<2x32xf32, #tpu.memory_space<vmem>>, %arg1: memref<2x8x32xf32, #tpu.memory_space<vmem>>, %arg2: memref<2x32xf32, #tpu.memory_space<vmem>>, %arg3: memref<2x32xf32, #tpu.memory_space<vmem>>, %arg4: memref<2x8x32xf32, #tpu.memory_space<vmem>>, %arg5: memref<8x32xf32, #tpu.memory_space<vmem>>, %arg6: memref<2x8xf32, #tpu.memory_space<vmem>>, %arg7: memref<32x96xf32, #tpu.memory_space<vmem>>, %arg8: memref<32x64xf32, #tpu.memory_space<vmem>>, %arg9: memref<128x128xf32, #tpu.memory_space<vmem>>, %arg10: memref<64x64xf32, #tpu.memory_space<vmem>>, %arg11: memref<4x128xf32, #tpu.memory_space<vmem>>, %arg12: memref<2x32xf32, #tpu.memory_space<vmem>>, %arg13: memref<2x32xf32, #tpu.memory_space<vmem>>, %arg14: memref<2x8xf32, #tpu.memory_space<vmem>>, %arg15: memref<2x8xf32, #tpu.memory_space<vmem>>, %arg16: memref<2x8xf32, #tpu.memory_space<vmem>>) attributes {dimension_semantics = [], scalar_prefetch = 0 : i64, scratch_operands = 0 : i64, tpu.core_type = #tpu.core_type<tc>} {
    %c0 = arith.constant 0 : index
    %c0_0 = arith.constant 0 : index
    %0 = vector.load %arg11[%c0, %c0_0] : memref<4x128xf32, #tpu.memory_space<vmem>>, vector<1x96xf32>
    %c1 = arith.constant 1 : index
    %c0_1 = arith.constant 0 : index
    %1 = vector.load %arg11[%c1, %c0_1] : memref<4x128xf32, #tpu.memory_space<vmem>>, vector<1x64xf32>
    %c2 = arith.constant 2 : index
    %c0_2 = arith.constant 0 : index
    %2 = vector.load %arg11[%c2, %c0_2] : memref<4x128xf32, #tpu.memory_space<vmem>>, vector<1x128xf32>
    %c3 = arith.constant 3 : index
    %c0_3 = arith.constant 0 : index
    %3 = vector.load %arg11[%c3, %c0_3] : memref<4x128xf32, #tpu.memory_space<vmem>>, vector<1x64xf32>
    %c0_4 = arith.constant 0 : index
    %c0_5 = arith.constant 0 : index
    %4 = vector.load %arg2[%c0_4, %c0_5] : memref<2x32xf32, #tpu.memory_space<vmem>>, vector<2x32xf32>
    %c0_6 = arith.constant 0 : index
    %c0_7 = arith.constant 0 : index
    %c0_8 = arith.constant 0 : index
    %5 = vector.load %arg4[%c0_6, %c0_7, %c0_8] : memref<2x8x32xf32, #tpu.memory_space<vmem>>, vector<2x8x32xf32>
    %c0_9 = arith.constant 0 : index
    %c0_10 = arith.constant 0 : index
    %c0_11 = arith.constant 0 : index
    %6 = vector.load %arg1[%c0_9, %c0_10, %c0_11] : memref<2x8x32xf32, #tpu.memory_space<vmem>>, vector<2x8x32xf32>
    %c0_12 = arith.constant 0 : index
    %c0_13 = arith.constant 0 : index
    %7 = vector.load %arg7[%c0_12, %c0_13] : memref<32x96xf32, #tpu.memory_space<vmem>>, vector<32x96xf32>
    %cst = arith.constant dense<0.000000e+00> : vector<2x96xf32>
    %8 = tpu.matmul %4, %7, %cst {dimension_numbers = #tpu.dot_dimension_numbers<[1], [0], [0], [1], [0, 0, 1, 1], [], []>} : vector<2x32xf32>, vector<32x96xf32>, vector<2x96xf32> -> vector<2x96xf32>
    %9 = vector.broadcast %0 : vector<1x96xf32> to vector<2x96xf32>
    %10 = arith.addf %8, %9 : vector<2x96xf32>
    %11 = vector.extract_strided_slice %10 {offsets = [0, 0], sizes = [2, 32], strides = [1, 1]} : vector<2x96xf32> to vector<2x32xf32>
    %12 = vector.extract_strided_slice %10 {offsets = [0, 32], sizes = [2, 64], strides = [1, 1]} : vector<2x96xf32> to vector<2x64xf32>
    %c0_14 = arith.constant 0 : index
    %c0_15 = arith.constant 0 : index
    %13 = vector.load %arg5[%c0_14, %c0_15] : memref<8x32xf32, #tpu.memory_space<vmem>>, vector<8x32xf32>
    %14 = vector.shape_cast %13 : vector<8x32xf32> to vector<1x8x32xf32>
    %15 = vector.broadcast %14 : vector<1x8x32xf32> to vector<2x8x32xf32>
    %16 = arith.addf %5, %15 : vector<2x8x32xf32>
    %17 = vector.shape_cast %11 : vector<2x32xf32> to vector<2x1x32xf32>
    %18 = vector.broadcast %17 : vector<2x1x32xf32> to vector<2x8x32xf32>
    %19 = arith.mulf %16, %18 : vector<2x8x32xf32>
    %cst_16 = arith.constant dense<0.000000e+00> : vector<2x8xf32>
    %20 = vector.multi_reduction <add>, %19, %cst_16 [2] : vector<2x8x32xf32> to vector<2x8xf32>
    %c0_17 = arith.constant 0 : index
    %c0_18 = arith.constant 0 : index
    %21 = vector.load %arg6[%c0_17, %c0_18] : memref<2x8xf32, #tpu.memory_space<vmem>>, vector<2x8xf32>
    %22 = arith.addf %20, %21 : vector<2x8xf32>
    %cst_19 = arith.constant dense<0xFF800000> : vector<2xf32>
    %23 = vector.multi_reduction <maximumf>, %22, %cst_19 [1] : vector<2x8xf32> to vector<2xf32>
    %24 = vector.shape_cast %23 : vector<2xf32> to vector<2x1xf32>
    %25 = vector.broadcast %24 : vector<2x1xf32> to vector<2x8xf32>
    %26 = arith.subf %22, %25 : vector<2x8xf32>
    %27 = math.exp %26 : vector<2x8xf32>
    %cst_20 = arith.constant dense<0.000000e+00> : vector<2xf32>
    %28 = vector.multi_reduction <add>, %27, %cst_20 [1] : vector<2x8xf32> to vector<2xf32>
    %29 = vector.shape_cast %28 : vector<2xf32> to vector<2x1xf32>
    %30 = vector.broadcast %29 : vector<2x1xf32> to vector<2x8xf32>
    %31 = arith.divf %27, %30 : vector<2x8xf32>
    %c0_21 = arith.constant 0 : index
    %c0_22 = arith.constant 0 : index
    %32 = vector.load %arg14[%c0_21, %c0_22] : memref<2x8xf32, #tpu.memory_space<vmem>>, vector<2x8xf32>
    tpu.vector_store %arg14[%c0_21, %c0_22], %31 {strides = array<i32>} : memref<2x8xf32, #tpu.memory_space<vmem>>, vector<2x8xf32>,
    %33 = vector.shape_cast %31 : vector<2x8xf32> to vector<2x8x1xf32>
    %34 = vector.broadcast %33 : vector<2x8x1xf32> to vector<2x8x32xf32>
    %35 = arith.mulf %34, %5 : vector<2x8x32xf32>
    %cst_23 = arith.constant dense<0.000000e+00> : vector<2x32xf32>
    %36 = vector.multi_reduction <add>, %35, %cst_23 [1] : vector<2x8x32xf32> to vector<2x32xf32>
    %37 = vector.shape_cast %6 : vector<2x8x32xf32> to vector<16x32xf32>
    %c0_24 = arith.constant 0 : index
    %c0_25 = arith.constant 0 : index
    %38 = vector.load %arg8[%c0_24, %c0_25] : memref<32x64xf32, #tpu.memory_space<vmem>>, vector<32x64xf32>
    %cst_26 = arith.constant dense<0.000000e+00> : vector<16x64xf32>
    %39 = tpu.matmul %37, %38, %cst_26 {dimension_numbers = #tpu.dot_dimension_numbers<[1], [0], [0], [1], [0, 0, 1, 1], [], []>} : vector<16x32xf32>, vector<32x64xf32>, vector<16x64xf32> -> vector<16x64xf32>
    %40 = vector.broadcast %1 : vector<1x64xf32> to vector<16x64xf32>
    %41 = arith.addf %39, %40 : vector<16x64xf32>
    %cst_27 = arith.constant 0.000000e+00 : f32
    %42 = vector.broadcast %cst_27 : f32 to vector<16x64xf32>
    %43 = arith.maximumf %41, %42 : vector<16x64xf32>
    %44 = vector.shape_cast %43 : vector<16x64xf32> to vector<2x8x64xf32>
    %45 = vector.shape_cast %12 : vector<2x64xf32> to vector<2x1x64xf32>
    %46 = vector.broadcast %45 : vector<2x1x64xf32> to vector<2x8x64xf32>
    %47 = arith.mulf %44, %46 : vector<2x8x64xf32>
    %cst_28 = arith.constant dense<0.000000e+00> : vector<2x8xf32>
    %48 = vector.multi_reduction <add>, %47, %cst_28 [2] : vector<2x8x64xf32> to vector<2x8xf32>
    %cst_29 = arith.constant dense<0xFF800000> : vector<2xf32>
    %49 = vector.multi_reduction <maximumf>, %48, %cst_29 [1] : vector<2x8xf32> to vector<2xf32>
    %50 = vector.shape_cast %49 : vector<2xf32> to vector<2x1xf32>
    %51 = vector.broadcast %50 : vector<2x1xf32> to vector<2x8xf32>
    %52 = arith.subf %48, %51 : vector<2x8xf32>
    %53 = math.exp %52 : vector<2x8xf32>
    %cst_30 = arith.constant dense<0.000000e+00> : vector<2xf32>
    %54 = vector.multi_reduction <add>, %53, %cst_30 [1] : vector<2x8xf32> to vector<2xf32>
    %55 = vector.shape_cast %54 : vector<2xf32> to vector<2x1xf32>
    %56 = vector.broadcast %55 : vector<2x1xf32> to vector<2x8xf32>
    %57 = arith.divf %53, %56 : vector<2x8xf32>
    %c0_31 = arith.constant 0 : index
    %c0_32 = arith.constant 0 : index
    %58 = vector.load %arg16[%c0_31, %c0_32] : memref<2x8xf32, #tpu.memory_space<vmem>>, vector<2x8xf32>
    tpu.vector_store %arg16[%c0_31, %c0_32], %57 {strides = array<i32>} : memref<2x8xf32, #tpu.memory_space<vmem>>, vector<2x8xf32>,
    %59 = vector.shape_cast %57 : vector<2x8xf32> to vector<2x8x1xf32>
    %60 = vector.broadcast %59 : vector<2x8x1xf32> to vector<2x8x32xf32>
    %61 = arith.mulf %60, %6 : vector<2x8x32xf32>
    %cst_33 = arith.constant dense<0.000000e+00> : vector<2x32xf32>
    %62 = vector.multi_reduction <add>, %61, %cst_33 [1] : vector<2x8x32xf32> to vector<2x32xf32>
    %c0_34 = arith.constant 0 : index
    %c0_35 = arith.constant 0 : index
    %63 = vector.load %arg0[%c0_34, %c0_35] : memref<2x32xf32, #tpu.memory_space<vmem>>, vector<2x32xf32>
    %64 = tpu.concatenate %36, %62, %63, %4 in 1 : vector<2x32xf32>, vector<2x32xf32>, vector<2x32xf32>, vector<2x32xf32> -> vector<2x128xf32>
    %c0_36 = arith.constant 0 : index
    %c0_37 = arith.constant 0 : index
    %65 = vector.load %arg9[%c0_36, %c0_37] : memref<128x128xf32, #tpu.memory_space<vmem>>, vector<128x128xf32>
    %cst_38 = arith.constant dense<0.000000e+00> : vector<2x128xf32>
    %66 = tpu.matmul %64, %65, %cst_38 {dimension_numbers = #tpu.dot_dimension_numbers<[1], [0], [0], [1], [0, 0, 1, 1], [], []>} : vector<2x128xf32>, vector<128x128xf32>, vector<2x128xf32> -> vector<2x128xf32>
    %67 = vector.broadcast %2 : vector<1x128xf32> to vector<2x128xf32>
    %68 = arith.addf %66, %67 : vector<2x128xf32>
    %69 = vector.extract_strided_slice %68 {offsets = [0, 0], sizes = [2, 32], strides = [1, 1]} : vector<2x128xf32> to vector<2x32xf32>
    %70 = arith.negf %69 : vector<2x32xf32>
    %71 = math.exp %70 : vector<2x32xf32>
    %cst_39 = arith.constant 1.000000e+00 : f32
    %72 = vector.broadcast %cst_39 : f32 to vector<2x32xf32>
    %73 = arith.addf %72, %71 : vector<2x32xf32>
    %74 = arith.divf %72, %73 : vector<2x32xf32>
    %75 = vector.extract_strided_slice %68 {offsets = [0, 32], sizes = [2, 32], strides = [1, 1]} : vector<2x128xf32> to vector<2x32xf32>
    %76 = arith.negf %75 : vector<2x32xf32>
    %77 = math.exp %76 : vector<2x32xf32>
    %cst_40 = arith.constant 1.000000e+00 : f32
    %78 = vector.broadcast %cst_40 : f32 to vector<2x32xf32>
    %79 = arith.addf %78, %77 : vector<2x32xf32>
    %80 = arith.divf %78, %79 : vector<2x32xf32>
    %81 = vector.extract_strided_slice %68 {offsets = [0, 64], sizes = [2, 32], strides = [1, 1]} : vector<2x128xf32> to vector<2x32xf32>
    %82 = math.tanh %81 : vector<2x32xf32>
    %83 = vector.extract_strided_slice %68 {offsets = [0, 96], sizes = [2, 32], strides = [1, 1]} : vector<2x128xf32> to vector<2x32xf32>
    %84 = arith.negf %83 : vector<2x32xf32>
    %85 = math.exp %84 : vector<2x32xf32>
    %cst_41 = arith.constant 1.000000e+00 : f32
    %86 = vector.broadcast %cst_41 : f32 to vector<2x32xf32>
    %87 = arith.addf %86, %85 : vector<2x32xf32>
    %88 = arith.divf %86, %87 : vector<2x32xf32>
    %c0_42 = arith.constant 0 : index
    %c0_43 = arith.constant 0 : index
    %89 = vector.load %arg3[%c0_42, %c0_43] : memref<2x32xf32, #tpu.memory_space<vmem>>, vector<2x32xf32>
    %90 = arith.mulf %80, %89 : vector<2x32xf32>
    %91 = arith.mulf %74, %82 : vector<2x32xf32>
    %92 = arith.addf %90, %91 : vector<2x32xf32>
    %93 = math.tanh %92 : vector<2x32xf32>
    %94 = arith.mulf %88, %93 : vector<2x32xf32>
    %c0_44 = arith.constant 0 : index
    %c0_45 = arith.constant 0 : index
    %95 = vector.load %arg13[%c0_44, %c0_45] : memref<2x32xf32, #tpu.memory_space<vmem>>, vector<2x32xf32>
    tpu.vector_store %arg13[%c0_44, %c0_45], %92 {strides = array<i32>} : memref<2x32xf32, #tpu.memory_space<vmem>>, vector<2x32xf32>,
    %c0_46 = arith.constant 0 : index
    %c0_47 = arith.constant 0 : index
    %96 = vector.load %arg12[%c0_46, %c0_47] : memref<2x32xf32, #tpu.memory_space<vmem>>, vector<2x32xf32>
    tpu.vector_store %arg12[%c0_46, %c0_47], %94 {strides = array<i32>} : memref<2x32xf32, #tpu.memory_space<vmem>>, vector<2x32xf32>,
    %97 = tpu.concatenate %36, %94 in 1 : vector<2x32xf32>, vector<2x32xf32> -> vector<2x64xf32>
    %c0_48 = arith.constant 0 : index
    %c0_49 = arith.constant 0 : index
    %98 = vector.load %arg10[%c0_48, %c0_49] : memref<64x64xf32, #tpu.memory_space<vmem>>, vector<64x64xf32>
    %cst_50 = arith.constant dense<0.000000e+00> : vector<2x64xf32>
    %99 = tpu.matmul %97, %98, %cst_50 {dimension_numbers = #tpu.dot_dimension_numbers<[1], [0], [0], [1], [0, 0, 1, 1], [], []>} : vector<2x64xf32>, vector<64x64xf32>, vector<2x64xf32> -> vector<2x64xf32>
    %100 = vector.broadcast %3 : vector<1x64xf32> to vector<2x64xf32>
    %101 = arith.addf %99, %100 : vector<2x64xf32>
    %102 = vector.shape_cast %101 : vector<2x64xf32> to vector<2x1x64xf32>
    %103 = vector.broadcast %102 : vector<2x1x64xf32> to vector<2x8x64xf32>
    %104 = arith.mulf %44, %103 : vector<2x8x64xf32>
    %cst_51 = arith.constant dense<0.000000e+00> : vector<2x8xf32>
    %105 = vector.multi_reduction <add>, %104, %cst_51 [2] : vector<2x8x64xf32> to vector<2x8xf32>
    %c0_52 = arith.constant 0 : index
    %c0_53 = arith.constant 0 : index
    %106 = vector.load %arg15[%c0_52, %c0_53] : memref<2x8xf32, #tpu.memory_space<vmem>>, vector<2x8xf32>
    tpu.vector_store %arg15[%c0_52, %c0_53], %105 {strides = array<i32>} : memref<2x8xf32, #tpu.memory_space<vmem>>, vector<2x8xf32>,
    return
  }
}

</mosaic_0001>

<llo_original>
// kernel: coground_forward.1
$region0: #{coground_forward.1}
  #allocation0 [shape = 'u32[]', space=smem, size = 0x4, offset = 0x4, fixed_abs, tag = 'smem constant byte address 0x4 - core index']
  #allocation1 [shape = 'u32[72,128]{1,0:T(1,128)}', space=vmem, size = 0x9000, scoped, tag = 'internal scratch']
  %s0 = inlined_call_operand.vmem [shape: f32[2,32], index: 0, kind: input, shape index: {}]
  %s1 = inlined_call_operand.hbm [shape: f32[2,8,32], index: 1, kind: input, shape index: {}]
  %s2 = inlined_call_operand.vmem [shape: f32[2,32], index: 2, kind: input, shape index: {}]
  %s3 = inlined_call_operand.vmem [shape: f32[2,32], index: 3, kind: input, shape index: {}]
  %s4 = inlined_call_operand.hbm [shape: f32[2,8,32], index: 4, kind: input, shape index: {}]
  %s5 = inlined_call_operand.hbm [shape: f32[8,32], index: 5, kind: input, shape index: {}]
  %s6 = inlined_call_operand.vmem [shape: f32[2,8], index: 6, kind: input, shape index: {}]
  %s7 = inlined_call_operand.hbm [shape: f32[32,96], index: 7, kind: input, shape index: {}]
  %s8 = inlined_call_operand.hbm [shape: f32[32,64], index: 8, kind: input, shape index: {}]
  %s9 = inlined_call_operand.hbm [shape: f32[128,128], index: 9, kind: input, shape index: {}]
  %s10 = inlined_call_operand.hbm [shape: f32[64,64], index: 10, kind: input, shape index: {}]
  %s11 = inlined_call_operand.hbm [shape: f32[4,128], index: 11, kind: input, shape index: {}]
  %s12 = inlined_call_operand.hbm [shape: f32[2,32], index: 12, kind: output, shape index: {0}]
  %s13 = inlined_call_operand.hbm [shape: f32[2,32], index: 13, kind: output, shape index: {1}]
  %s14 = inlined_call_operand.hbm [shape: f32[2,8], index: 14, kind: output, shape index: {2}]
  %s15 = inlined_call_operand.hbm [shape: f32[2,8], index: 15, kind: output, shape index: {3}]
  %s16 = inlined_call_operand.hbm [shape: f32[2,8], index: 16, kind: output, shape index: {4}]
  %17 = xla_tuple %s12, %s13, %s14, %s15, %s16
  %s18 = sld [smem:[#allocation0]]
  $region122: #{coground_forward.1} parent=0
    _
  %s20 = ssub.s32 1, %s18
  %s21 = scalar_select 0, %s20, %s18
  $region1: #{coground_forward.1} parent=0
    #allocation2 [shape = 'u8[8192]{0}', space=vmem, size = 0x2000, scoped, tag = 'input window, operand 1, single buffered']
    #allocation3 [shape = 's32[1]{0}', space=sflag, size = 0x4, scoped, tag = 'scoped memory for coground_forward.1']
    #allocation4 [shape = 's32[1]{0}', space=sflag, size = 0x4, scoped, tag = 'scoped memory for coground_forward.1']
    #allocation5 [shape = 'u8[8192]{0}', space=vmem, size = 0x2000, scoped, tag = 'input window, operand 4, single buffered']
    #allocation6 [shape = 's32[1]{0}', space=sflag, size = 0x4, scoped, tag = 'scoped memory for coground_forward.1']
    #allocation7 [shape = 'u8[4096]{0}', space=vmem, size = 0x1000, scoped, tag = 'input window, operand 5, single buffered']
    #allocation8 [shape = 'u8[16384]{0}', space=vmem, size = 0x4000, scoped, tag = 'input window, operand 7, single buffered']
    #allocation9 [shape = 's32[1]{0}', space=sflag, size = 0x4, scoped, tag = 'scoped memory for coground_forward.1']
    #allocation10 [shape = 'u8[16384]{0}', space=vmem, size = 0x4000, scoped, tag = 'input window, operand 8, single buffered']
    #allocation11 [shape = 'u8[65536]{0}', space=vmem, size = 0x10000, scoped, tag = 'input window, operand 9, single buffered']
    #allocation12 [shape = 's32[1]{0}', space=sflag, size = 0x4, scoped, tag = 'scoped memory for coground_forward.1']
    #allocation13 [shape = 'u8[32768]{0}', space=vmem, size = 0x8000, scoped, tag = 'input window, operand 10, single buffered']
    #allocation14 [shape = 'u8[2048]{0}', space=vmem, size = 0x800, scoped, tag = 'input window, operand 11, single buffered']
    #allocation15 [shape = 's32[1]{0}', space=sflag, size = 0x4, scoped, tag = 'scoped memory for coground_forward.1']
    #allocation16 [shape = 'u8[1024]{0}', space=vmem, size = 0x400, scoped, tag = 'output window, operand 0, single buffered']
    #allocation17 [shape = 'u8[1024]{0}', space=vmem, size = 0x400, scoped, tag = 'output window, operand 1, single buffered']
    #allocation18 [shape = 's32[1]{0}', space=sflag, size = 0x4, scoped, tag = 'scoped memory for coground_forward.1']
    #allocation19 [shape = 'u8[1024]{0}', space=vmem, size = 0x400, scoped, tag = 'output window, operand 2, single buffered']
    #allocation20 [shape = 'u8[1024]{0}', space=vmem, size = 0x400, scoped, tag = 'output window, operand 3, single buffered']
    #allocation21 [shape = 's32[1]{0}', space=sflag, size = 0x4, scoped, tag = 'scoped memory for coground_forward.1']
    #allocation22 [shape = 'u8[1024]{0}', space=vmem, size = 0x400, scoped, tag = 'output window, operand 4, single buffered']
    %22 = vsyncpa [#allocation3], 0
    %23 = vsyncpa [#allocation6], 0
    %24 = vsyncpa [#allocation9], 0
    %25 = vsyncpa [#allocation12], 0
    %26 = vsyncpa [#allocation15], 0
    %27 = vsyncpa [#allocation4], 0
    %28 = vsyncpa [#allocation18], 0
    %29 = vsyncpa [#allocation21], 0
    // Predicated region
    $region2: #{coground_forward.1} parent=1 // pred_check
      _
    $region3: #{coground_forward.1} parent=1 // pred_check_branch
      %31 = sbr.rel (0) target = $region5
    $region4: #{coground_forward.1} parent=1 // pred_region
      _
    $region5: #{coground_forward.1} parent=1 // pred_fallthru
      _
    // Predicated region
    $region6: #{coground_forward.1} parent=1 // pred_check
      _
    $region7: #{coground_forward.1} parent=1 // pred_check_branch
      %33 = sbr.rel (0) target = $region9
    $region8: #{coground_forward.1} parent=1 // pred_region
      %35 = vsyncadd [#allocation3], 0
      %s36 = sshll.u32 %s1, 4
      %s37 = int_to_ptr.hbm [resolvable:$true] %s36
      %s38 = sshll.u32 [#allocation2], 4
      %s39 = int_to_ptr.vmem [resolvable:$true] %s38
      %44 = dma.hbm_to_vmem [thread:$0]  %s37, 256, %s39, [#allocation3], 128, 128, 8
    $region9: #{coground_forward.1} parent=1 // pred_fallthru
      _
    // Predicated region
    $region10: #{coground_forward.1} parent=1 // pred_check
      _
    $region11: #{coground_forward.1} parent=1 // pred_check_branch
      %46 = sbr.rel (0) target = $region13
    $region12: #{coground_forward.1} parent=1 // pred_region
      _
    $region13: #{coground_forward.1} parent=1 // pred_fallthru
      _
    // Predicated region
    $region14: #{coground_forward.1} parent=1 // pred_check
      _
    $region15: #{coground_forward.1} parent=1 // pred_check_branch
      %48 = sbr.rel (0) target = $region17
    $region16: #{coground_forward.1} parent=1 // pred_region
      _
    $region17: #{coground_forward.1} parent=1 // pred_fallthru
      _
    // Predicated region
    $region18: #{coground_forward.1} parent=1 // pred_check
      _
    $region19: #{coground_forward.1} parent=1 // pred_check_branch
      %50 = sbr.rel (0) target = $region21
    $region20: #{coground_forward.1} parent=1 // pred_region
      %52 = vsyncadd [#allocation6], 0
      %s53 = sshll.u32 %s4, 4
      %s54 = int_to_ptr.hbm [resolvable:$true] %s53
      %s55 = sshll.u32 [#allocation5], 4
      %s56 = int_to_ptr.vmem [resolvable:$true] %s55
      %61 = dma.hbm_to_vmem [thread:$0]  %s54, 256, %s56, [#allocation6], 128, 128, 8
    $region21: #{coground_forward.1} parent=1 // pred_fallthru
      _
    // Predicated region
    $region22: #{coground_forward.1} parent=1 // pred_check
      _
    $region23: #{coground_forward.1} parent=1 // pred_check_branch
      %63 = sbr.rel (0) target = $region25
    $region24: #{coground_forward.1} parent=1 // pred_region
      %65 = vsyncadd [#allocation6], 0
      %s67 = sshll.u32 %s5, 4
      %s68 = int_to_ptr.hbm [resolvable:$true] %s67
      %s69 = sshll.u32 [#allocation7], 4
      %s70 = int_to_ptr.vmem [resolvable:$true] %s69
      %72 = dma.hbm_to_vmem [thread:$0]  %s68, 128, %s70, [#allocation6]
    $region25: #{coground_forward.1} parent=1 // pred_fallthru
      _
    // Predicated region
    $region26: #{coground_forward.1} parent=1 // pred_check
      _
    $region27: #{coground_forward.1} parent=1 // pred_check_branch
      %74 = sbr.rel (0) target = $region29
    $region28: #{coground_forward.1} parent=1 // pred_region
      _
    $region29: #{coground_forward.1} parent=1 // pred_fallthru
      _
    // Predicated region
    $region30: #{coground_forward.1} parent=1 // pred_check
      _
    $region31: #{coground_forward.1} parent=1 // pred_check_branch
      %76 = sbr.rel (0) target = $region33
    $region32: #{coground_forward.1} parent=1 // pred_region
      %78 = vsyncadd [#allocation9], 0
      %s79 = sshll.u32 %s7, 4
      %s80 = int_to_ptr.hbm [resolvable:$true] %s79
      %s81 = sshll.u32 [#allocation8], 4
      %s82 = int_to_ptr.vmem [resolvable:$true] %s81
      %87 = dma.hbm_to_vmem [thread:$0]  %s80, 512, %s82, [#allocation9], 128, 128, 8
    $region33: #{coground_forward.1} parent=1 // pred_fallthru
      _
    // Predicated region
    $region34: #{coground_forward.1} parent=1 // pred_check
      _
    $region35: #{coground_forward.1} parent=1 // pred_check_branch
      %89 = sbr.rel (0) target = $region37
    $region36: #{coground_forward.1} parent=1 // pred_region
      %91 = vsyncadd [#allocation9], 0
      %s92 = sshll.u32 %s8, 4
      %s93 = int_to_ptr.hbm [resolvable:$true] %s92
      %s94 = sshll.u32 [#allocation10], 4
      %s95 = int_to_ptr.vmem [resolvable:$true] %s94
      %100 = dma.hbm_to_vmem [thread:$0]  %s93, 512, %s95, [#allocation9], 128, 128, 8
    $region37: #{coground_forward.1} parent=1 // pred_fallthru
      _
    // Predicated region
    $region38: #{coground_forward.1} parent=1 // pred_check
      _
    $region39: #{coground_forward.1} parent=1 // pred_check_branch
      %102 = sbr.rel (0) target = $region41
    $region40: #{coground_forward.1} parent=1 // pred_region
      %104 = vsyncadd [#allocation12], 0
      %s105 = sshll.u32 %s9, 4
      %s106 = int_to_ptr.hbm [resolvable:$true] %s105
      %s107 = sshll.u32 [#allocation11], 4
      %s108 = int_to_ptr.vmem [resolvable:$true] %s107
      %113 = dma.hbm_to_vmem [thread:$0]  %s106, 2048, %s108, [#allocation12], 128, 128, 8
    $region41: #{coground_forward.1} parent=1 // pred_fallthru
      _
    // Predicated region
    $region42: #{coground_forward.1} parent=1 // pred_check
      _
    $region43: #{coground_forward.1} parent=1 // pred_check_branch
      %115 = sbr.rel (0) target = $region45
    $region44: #{coground_forward.1} parent=1 // pred_region
      %117 = vsyncadd [#allocation12], 0
      %s118 = sshll.u32 %s10, 4
      %s119 = int_to_ptr.hbm [resolvable:$true] %s118
      %s120 = sshll.u32 [#allocation13], 4
      %s121 = int_to_ptr.vmem [resolvable:$true] %s120
      %126 = dma.hbm_to_vmem [thread:$0]  %s119, 1024, %s121, [#allocation12], 128, 128, 8
    $region45: #{coground_forward.1} parent=1 // pred_fallthru
      _
    // Predicated region
    $region46: #{coground_forward.1} parent=1 // pred_check
      _
    $region47: #{coground_forward.1} parent=1 // pred_check_branch
      %128 = sbr.rel (0) target = $region49
    $region48: #{coground_forward.1} parent=1 // pred_region
      %130 = vsyncadd [#allocation15], 0
      %s132 = sshll.u32 %s11, 4
      %s133 = int_to_ptr.hbm [resolvable:$true] %s132
      %s134 = sshll.u32 [#allocation14], 4
      %s135 = int_to_ptr.vmem [resolvable:$true] %s134
      %137 = dma.hbm_to_vmem [thread:$0]  %s133, 64, %s135, [#allocation15]
    $region49: #{coground_forward.1} parent=1 // pred_fallthru
      _
    // Predicated region
    $region50: #{coground_forward.1} parent=1 // pred_check
      _
    $region51: #{coground_forward.1} parent=1 // pred_check_branch
      %139 = sbr.rel (0) target = $region53
    $region52: #{coground_forward.1} parent=1 // pred_region
      %141 = dma.done [#allocation3], 256
    $region53: #{coground_forward.1} parent=1 // pred_fallthru
      _
    // Predicated region
    $region54: #{coground_forward.1} parent=1 // pred_check
      _
    $region55: #{coground_forward.1} parent=1 // pred_check_branch
      %143 = sbr.rel (0) target = $region57
    $region56: #{coground_forward.1} parent=1 // pred_region
      %145 = dma.done [#allocation6], 256
    $region57: #{coground_forward.1} parent=1 // pred_fallthru
      _
    // Predicated region
    $region58: #{coground_forward.1} parent=1 // pred_check
      _
    $region59: #{coground_forward.1} parent=1 // pred_check_branch
      %147 = sbr.rel (0) target = $region61
    $region60: #{coground_forward.1} parent=1 // pred_region
      %149 = dma.done [#allocation6], 128
    $region61: #{coground_forward.1} parent=1 // pred_fallthru
      _
    // Predicated region
    $region62: #{coground_forward.1} parent=1 // pred_check
      _
    $region63: #{coground_forward.1} parent=1 // pred_check_branch
      %151 = sbr.rel (0) target = $region65
    $region64: #{coground_forward.1} parent=1 // pred_region
      %153 = dma.done [#allocation9], 512
    $region65: #{coground_forward.1} parent=1 // pred_fallthru
      _
    // Predicated region
    $region66: #{coground_forward.1} parent=1 // pred_check
      _
    $region67: #{coground_forward.1} parent=1 // pred_check_branch
      %155 = sbr.rel (0) target = $region69
    $region68: #{coground_forward.1} parent=1 // pred_region
      %157 = dma.done [#allocation9], 512
    $region69: #{coground_forward.1} parent=1 // pred_fallthru
      _
    // Predicated region
    $region70: #{coground_forward.1} parent=1 // pred_check
      _
    $region71: #{coground_forward.1} parent=1 // pred_check_branch
      %159 = sbr.rel (0) target = $region73
    $region72: #{coground_forward.1} parent=1 // pred_region
      %161 = dma.done [#allocation12], 2048
    $region73: #{coground_forward.1} parent=1 // pred_fallthru
      _
    // Predicated region
    $region74: #{coground_forward.1} parent=1 // pred_check
      _
    $region75: #{coground_forward.1} parent=1 // pred_check_branch
      %163 = sbr.rel (0) target = $region77
    $region76: #{coground_forward.1} parent=1 // pred_region
      %165 = dma.done [#allocation12], 1024
    $region77: #{coground_forward.1} parent=1 // pred_fallthru
      _
    // Predicated region
    $region78: #{coground_forward.1} parent=1 // pred_check
      _
    $region79: #{coground_forward.1} parent=1 // pred_check_branch
      %167 = sbr.rel (0) target = $region81
    $region80: #{coground_forward.1} parent=1 // pred_region
      %169 = dma.done [#allocation15], 64
    $region81: #{coground_forward.1} parent=1 // pred_fallthru
      _
    %v170 = vld [vmem:[#allocation14] sm:$0x1]
    %v171 = vld [vmem:[#allocation14 + $0x1] sm:$0x1]
    %v172 = vld [vmem:[#allocation14 + $0x2] sm:$0x1]
    %v173 = vld [vmem:[#allocation14 + $0x3] sm:$0x1]
    %v174 = vld [vmem:[%s2] sm:$0x3]
    %v175 = vld [vmem:[#allocation5] sm:$0xff]
    %v176 = vld [vmem:[#allocation5 + $0x8] sm:$0xff]
    %v177 = vld [vmem:[#allocation2] sm:$0xff]
    %v178 = vld [vmem:[#allocation2 + $0x8] sm:$0xff]
    %v179 = vld [vmem:[#allocation8] sm:$0xff]
    %v180 = vld [vmem:[#allocation8 + $0x8] sm:$0xff]
    %v181 = vld [vmem:[#allocation8 + $0x10] sm:$0xff]
    %v182 = vld [vmem:[#allocation8 + $0x18] sm:$0xff]
    %v183 = vperm.slane %v170, 0
    %vm184 = vcmask 261120
    %v186 = vsel %vm184, %v174, 0
    %188 = vmatpush.msra.mxu0 0.0
    %189 = vmatpush.msra.mxu0 0.0
    %190 = vmatpush.msra.mxu0 0.0
    %191 = vmatpush.msra.mxu0 0.0
    %192 = vmatpush.msra.mxu0 0.0
    %193 = vmatpush.msra.mxu0 0.0
    %194 = vmatpush.msra.mxu0 0.0
    %195 = vmatpush.msra.mxu0 0.0
    %196 = vmatpush.msra.mxu0 0.0
    %197 = vmatpush.msra.mxu0 0.0
    %198 = vmatpush.msra.mxu0 0.0
    %199 = vmatpush.msra.mxu0 0.0
    %200 = vmatpush.msra.mxu0 %v182
    %201 = vmatpush.msra.mxu0 %v181
    %202 = vmatpush.msra.mxu0 %v180
    %203 = vmatpush.msra.mxu0 %v179
    %204 = vmatmul.f32.gmra.mxu0 %v186
    %v205 = vpop.f32.mrf.mxu0
    %v206 = vadd.f32 %v183, %v205
    %207 = vdwg.mxu0
    %v208 = vld [vmem:[#allocation7] sm:$0xff]
    %v209 = vadd.f32 %v175, %v208
    %v210 = vadd.f32 %v176, %v208
    %v212 = vrot.slane %v206, 1
    %v213 = vperm.slane %v206, 0
    %v214 = vperm.slane %v212, 0
    %v217 = vmul.f32 %v209, %v213
    %v218 = vmul.f32 %v210, %v214
    %v219 = vsel %vm184, %v217, 0.0
    %220 = vadd.xlane.f32.xlu0 %v219
    %v221 = vpop.xlane.xlu0 %220
    %v222 = vsel %vm184, %v218, 0.0
    %223 = vadd.xlane.f32.xlu0 %v222
    %v224 = vpop.xlane.xlu0 %223
    %v225 = vld [vmem:[%s6] sm:$0x3]
    %v227 = vperm.slane %v225, 0
    %v228 = vlaneseq
    %v229 = vshrl.u32 %v228, 7
    %231 = vset.pattern.permute.xlu0 %v229
    %232 = vperm.xlu0 %231, %v227
    %v233 = vpop.permute.xlu0 %232
    %v234 = vperm.slane %v225, 1
    %v235 = vlaneseq
    %v236 = vshrl.u32 %v235, 7
    %238 = vset.pattern.permute.xlu0 %v236
    %239 = vperm.xlu0 %238, %v234
    %v240 = vpop.permute.xlu0 %239
    %v243 = vadd.f32 %v221, %v233
    %v244 = vadd.f32 %v224, %v240
    %247 = vset.pattern.permute.xlu0 0
    %248 = vperm.xlu0 %247, %v243
    %v249 = vpop.permute.xlu0 %248
    %250 = vset.pattern.permute.xlu0 0
    %251 = vperm.xlu0 %250, %v244
    %v252 = vpop.permute.xlu0 %251
    %v253 = vlaneseq
    %v254 = vand.u32 %v253, 127
    %v255 = vperm.slane %v249, %v254
    %v256 = vperm.slane %v252, %v254
    %vm257 = vcmask 1041409
    %v258 = vsel %vm257, %v256, %v255
    %vm260 = vcmask 58368
    %v261 = vsel %vm260, %v258, -inf
    %262 = vmax.xlane.f32.xlu0 %v261
    %v263 = vpop.xlane.xlu0 %262
    %v265 = vperm.slane %v263, 0
    %v266 = vperm.slane %v263, 1
    %v269 = vsub.f32 %v243, %v265
    %v270 = vsub.f32 %v244, %v266
    %v271 = vmul.f32 %v269, 1.442695
    %v272 = vpow.pop %v271
    %v273 = vmul.f32 %v270, 1.442695
    %v274 = vpow.pop %v273
    %277 = vset.pattern.permute.xlu0 0
    %278 = vperm.xlu0 %277, %v272
    %v279 = vpop.permute.xlu0 %278
    %280 = vset.pattern.permute.xlu0 0
    %281 = vperm.xlu0 %280, %v274
    %v282 = vpop.permute.xlu0 %281
    %v283 = vperm.slane %v279, %v254
    %v284 = vperm.slane %v282, %v254
    %v285 = vsel %vm257, %v284, %v283
    %v287 = vsel %vm260, %v285, 0.0
    %288 = vadd.xlane.f32.xlu0 %v287
    %v289 = vpop.xlane.xlu0 %288
    %v291 = vperm.slane %v289, 0
    %v292 = vperm.slane %v289, 1
    %v295 = vrcp.pop %v291
    %v296 = vmul.f32 %v291, %v295
    %v297 = vsub.f32 1.0, %v296
    %v298 = vmul.f32 %v295, %v297
    %v299 = vadd.f32 %v295, %v298
    %vm300 = vweird.f32 %v291
    %vm301 = vweird.f32 %v295
    %vm302 = vmor %vm300, %vm301
    %v303 = vsel %vm302, %v295, %v299
    %v304 = vand.u32 2147483647, %v291
    %vm305 = vcmp.eq.f32.partialorder %v304, 8.507059e+37
    %v306 = vand.u32 %v291, 2147483648
    %v307 = vor.u32 1.1754944e-38, %v306
    %v308 = vsel %vm305, %v307, %v303
    %v309 = vmul.f32 %v272, %v308
    %v310 = vrcp.pop %v292
    %v311 = vmul.f32 %v292, %v310
    %v312 = vsub.f32 1.0, %v311
    %v313 = vmul.f32 %v310, %v312
    %v314 = vadd.f32 %v310, %v313
    %vm315 = vweird.f32 %v292
    %vm316 = vweird.f32 %v310
    %vm317 = vmor %vm315, %vm316
    %v318 = vsel %vm317, %v310, %v314
    %v319 = vand.u32 2147483647, %v292
    %vm320 = vcmp.eq.f32.partialorder %v319, 8.507059e+37
    %v321 = vand.u32 %v292, 2147483648
    %v322 = vor.u32 1.1754944e-38, %v321
    %v323 = vsel %vm320, %v322, %v318
    %v324 = vmul.f32 %v274, %v323
    %327 = vset.pattern.permute.xlu0 0
    %328 = vperm.xlu0 %327, %v309
    %v329 = vpop.permute.xlu0 %328
    %330 = vset.pattern.permute.xlu0 0
    %331 = vperm.xlu0 %330, %v324
    %v332 = vpop.permute.xlu0 %331
    %v333 = vperm.slane %v329, %v254
    %v334 = vperm.slane %v332, %v254
    %v335 = vsel %vm257, %v334, %v333
    %337 = vst.msk [vmem:[#allocation19] sm:$0x3] %vm260, %v335
    %v340 = vmul.f32 %v329, %v175
    %v341 = vmul.f32 %v332, %v176
    %v342 = vsel %vm184, %v340, 0.0
    %v343 = vrot.slane %v342, 4
    %v344 = vadd.f32 %v342, %v343
    %v345 = vrot.slane %v344, 2
    %v346 = vadd.f32 %v344, %v345
    %v347 = vrot.slane %v346, 1
    %v348 = vadd.f32 %v346, %v347
    %v349 = vsel %vm184, %v341, 0.0
    %v350 = vrot.slane %v349, 4
    %v351 = vadd.f32 %v349, %v350
    %v352 = vrot.slane %v351, 2
    %v353 = vadd.f32 %v351, %v352
    %v354 = vrot.slane %v353, 1
    %v355 = vadd.f32 %v353, %v354
    %v356 = vld [vmem:[#allocation10] sm:$0xff]
    %v357 = vld [vmem:[#allocation10 + $0x8] sm:$0xff]
    %v358 = vld [vmem:[#allocation10 + $0x10] sm:$0xff]
    %v359 = vld [vmem:[#allocation10 + $0x18] sm:$0xff]
    %v360 = vperm.slane %v171, 0
    %v362 = vsel %vm184, %v177, 0
    %v365 = vsel %vm184, %v178, 0
    %367 = vmatpush.msra.mxu0 0.0
    %368 = vmatpush.msra.mxu0 0.0
    %369 = vmatpush.msra.mxu0 0.0
    %370 = vmatpush.msra.mxu0 0.0
    %371 = vmatpush.msra.mxu0 0.0
    %372 = vmatpush.msra.mxu0 0.0
    %373 = vmatpush.msra.mxu0 0.0
    %374 = vmatpush.msra.mxu0 0.0
    %375 = vmatpush.msra.mxu0 0.0
    %376 = vmatpush.msra.mxu0 0.0
    %377 = vmatpush.msra.mxu0 0.0
    %378 = vmatpush.msra.mxu0 0.0
    %379 = vmatpush.msra.mxu0 %v359
    %380 = vmatpush.msra.mxu0 %v358
    %381 = vmatpush.msra.mxu0 %v357
    %382 = vmatpush.msra.mxu0 %v356
    %383 = vmatmul.f32.gmra.mxu0 %v362
    %v384 = vpop.f32.mrf.mxu0
    %v385 = vadd.f32 %v360, %v384
    %386 = vmatmul.f32.gmra.mxu0 %v365
    %v387 = vpop.f32.mrf.mxu0
    %v388 = vadd.f32 %v360, %v387
    %389 = vdwg.mxu0
    %v390 = vmax.f32 %v385, 0.0
    %v391 = vmax.f32 %v388, 0.0
    %392 = vrot.lane.b32.xlu0 %v213, 96
    %v393 = vpop.permute.xlu0 %392
    %394 = vrot.lane.b32.xlu0 %v214, 96
    %v395 = vpop.permute.xlu0 %394
    %v398 = vmul.f32 %v390, %v393
    %v399 = vmul.f32 %v391, %v395
    %vm400 = vcmask 523264
    %v401 = vsel %vm400, %v398, 0.0
    %402 = vadd.xlane.f32.xlu0 %v401
    %v403 = vpop.xlane.xlu0 %402
    %v404 = vsel %vm400, %v399, 0.0
    %405 = vadd.xlane.f32.xlu0 %v404
    %v406 = vpop.xlane.xlu0 %405
    %v409 = vperm.slane %v403, %v254
    %v410 = vperm.slane %v406, %v254
    %v411 = vsel %vm257, %v410, %v409
    %v413 = vsel %vm260, %v411, -inf
    %414 = vmax.xlane.f32.xlu0 %v413
    %v415 = vpop.xlane.xlu0 %414
    %v417 = vperm.slane %v415, 0
    %v418 = vperm.slane %v415, 1
    %v421 = vsub.f32 %v403, %v417
    %v422 = vsub.f32 %v406, %v418
    %v423 = vmul.f32 %v421, 1.442695
    %v424 = vpow.pop %v423
    %v425 = vmul.f32 %v422, 1.442695
    %v426 = vpow.pop %v425
    %429 = vset.pattern.permute.xlu0 0
    %430 = vperm.xlu0 %429, %v424
    %v431 = vpop.permute.xlu0 %430
    %432 = vset.pattern.permute.xlu0 0
    %433 = vperm.xlu0 %432, %v426
    %v434 = vpop.permute.xlu0 %433
    %v435 = vperm.slane %v431, %v254
    %v436 = vperm.slane %v434, %v254
    %v437 = vsel %vm257, %v436, %v435
    %v439 = vsel %vm260, %v437, 0.0
    %440 = vadd.xlane.f32.xlu0 %v439
    %v441 = vpop.xlane.xlu0 %440
    %v443 = vperm.slane %v441, 0
    %v444 = vperm.slane %v441, 1
    %v447 = vrcp.pop %v443
    %v448 = vmul.f32 %v443, %v447
    %v449 = vsub.f32 1.0, %v448
    %v450 = vmul.f32 %v447, %v449
    %v451 = vadd.f32 %v447, %v450
    %vm452 = vweird.f32 %v443
    %vm453 = vweird.f32 %v447
    %vm454 = vmor %vm452, %vm453
    %v455 = vsel %vm454, %v447, %v451
    %v456 = vand.u32 2147483647, %v443
    %vm457 = vcmp.eq.f32.partialorder %v456, 8.507059e+37
    %v458 = vand.u32 %v443, 2147483648
    %v459 = vor.u32 1.1754944e-38, %v458
    %v460 = vsel %vm457, %v459, %v455
    %v461 = vmul.f32 %v424, %v460
    %v462 = vrcp.pop %v444
    %v463 = vmul.f32 %v444, %v462
    %v464 = vsub.f32 1.0, %v463
    %v465 = vmul.f32 %v462, %v464
    %v466 = vadd.f32 %v462, %v465
    %vm467 = vweird.f32 %v444
    %vm468 = vweird.f32 %v462
    %vm469 = vmor %vm467, %vm468
    %v470 = vsel %vm469, %v462, %v466
    %v471 = vand.u32 2147483647, %v444
    %vm472 = vcmp.eq.f32.partialorder %v471, 8.507059e+37
    %v473 = vand.u32 %v444, 2147483648
    %v474 = vor.u32 1.1754944e-38, %v473
    %v475 = vsel %vm472, %v474, %v470
    %v476 = vmul.f32 %v426, %v475
    %479 = vset.pattern.permute.xlu0 0
    %480 = vperm.xlu0 %479, %v461
    %v481 = vpop.permute.xlu0 %480
    %482 = vset.pattern.permute.xlu0 0
    %483 = vperm.xlu0 %482, %v476
    %v484 = vpop.permute.xlu0 %483
    %v485 = vperm.slane %v481, %v254
    %v486 = vperm.slane %v484, %v254
    %v487 = vsel %vm257, %v486, %v485
    %489 = vst.msk [vmem:[#allocation22] sm:$0x3] %vm260, %v487
    %v492 = vmul.f32 %v481, %v177
    %v493 = vmul.f32 %v484, %v178
    %v494 = vsel %vm184, %v492, 0.0
    %v495 = vrot.slane %v494, 4
    %v496 = vadd.f32 %v494, %v495
    %v497 = vrot.slane %v496, 2
    %v498 = vadd.f32 %v496, %v497
    %v499 = vrot.slane %v498, 1
    %v500 = vadd.f32 %v498, %v499
    %v501 = vsel %vm184, %v493, 0.0
    %v502 = vrot.slane %v501, 4
    %v503 = vadd.f32 %v501, %v502
    %v504 = vrot.slane %v503, 2
    %v505 = vadd.f32 %v503, %v504
    %v506 = vrot.slane %v505, 1
    %v507 = vadd.f32 %v505, %v506
    %v508 = vld [vmem:[%s0] sm:$0x3]
    %v511 = vsel %vm257, %v355, %v348
    %v515 = vsel %vm257, %v507, %v500
    %516 = vrot.lane.b32.xlu0 %v515, 32
    %v517 = vpop.permute.xlu0 %516
    %520 = vrot.lane.b32.xlu0 %v508, 64
    %v521 = vpop.permute.xlu0 %520
    %523 = vrot.lane.b32.xlu0 %v174, 96
    %v524 = vpop.permute.xlu0 %523
    %v526 = vsel %vm184, %v511, %v517
    %v527 = vsel %vm400, %v526, %v521
    %vm528 = vcmask 785408
    %v529 = vsel %vm528, %v527, %v524
    %v530 = vld [vmem:[#allocation11] sm:$0xff]
    %v531 = vld [vmem:[#allocation11 + $0x8] sm:$0xff]
    %v532 = vld [vmem:[#allocation11 + $0x10] sm:$0xff]
    %v533 = vld [vmem:[#allocation11 + $0x18] sm:$0xff]
    %v534 = vld [vmem:[#allocation11 + $0x20] sm:$0xff]
    %v535 = vld [vmem:[#allocation11 + $0x28] sm:$0xff]
    %v536 = vld [vmem:[#allocation11 + $0x30] sm:$0xff]
    %v537 = vld [vmem:[#allocation11 + $0x38] sm:$0xff]
    %v538 = vld [vmem:[#allocation11 + $0x40] sm:$0xff]
    %v539 = vld [vmem:[#allocation11 + $0x48] sm:$0xff]
    %v540 = vld [vmem:[#allocation11 + $0x50] sm:$0xff]
    %v541 = vld [vmem:[#allocation11 + $0x58] sm:$0xff]
    %v542 = vld [vmem:[#allocation11 + $0x60] sm:$0xff]
    %v543 = vld [vmem:[#allocation11 + $0x68] sm:$0xff]
    %v544 = vld [vmem:[#allocation11 + $0x70] sm:$0xff]
    %v545 = vld [vmem:[#allocation11 + $0x78] sm:$0xff]
    %v546 = vperm.slane %v172, 0
    %547 = vmatpush.msra.mxu0 %v545
    %548 = vmatpush.msra.mxu0 %v544
    %549 = vmatpush.msra.mxu0 %v543
    %550 = vmatpush.msra.mxu0 %v542
    %551 = vmatpush.msra.mxu0 %v541
    %552 = vmatpush.msra.mxu0 %v540
    %553 = vmatpush.msra.mxu0 %v539
    %554 = vmatpush.msra.mxu0 %v538
    %555 = vmatpush.msra.mxu0 %v537
    %556 = vmatpush.msra.mxu0 %v536
    %557 = vmatpush.msra.mxu0 %v535
    %558 = vmatpush.msra.mxu0 %v534
    %559 = vmatpush.msra.mxu0 %v533
    %560 = vmatpush.msra.mxu0 %v532
    %561 = vmatpush.msra.mxu0 %v531
    %562 = vmatpush.msra.mxu0 %v530
    %563 = vmatmul.f32.gmra.mxu0 %v529
    %v564 = vpop.f32.mrf.mxu0
    %v565 = vadd.f32 %v546, %v564
    %566 = vdwg.mxu0
    %v567 = vxor.u32 %v565, 2147483648
    %v568 = vmul.f32 %v567, 1.442695
    %v569 = vpow.pop %v568
    %v570 = vadd.f32 %v569, 1.0
    %v571 = vrcp.pop %v570
    %v572 = vmul.f32 %v570, %v571
    %v573 = vsub.f32 1.0, %v572
    %v574 = vmul.f32 %v571, %v573
    %v575 = vadd.f32 %v571, %v574
    %vm576 = vweird.f32 %v570
    %vm577 = vweird.f32 %v571
    %vm578 = vmor %vm576, %vm577
    %v579 = vsel %vm578, %v571, %v575
    %v580 = vand.u32 2147483647, %v570
    %vm581 = vcmp.eq.f32.partialorder %v580, 8.507059e+37
    %v582 = vand.u32 %v570, 2147483648
    %v583 = vor.u32 1.1754944e-38, %v582
    %v584 = vsel %vm581, %v583, %v579
    %v585 = vmul.f32 1.0, %v584
    %v586 = vtanh.pop %v565
    %v587 = vld [vmem:[%s3] sm:$0x3]
    %589 = vrot.lane.b32.xlu0 %v587, 32
    %v590 = vpop.permute.xlu0 %589
    %v592 = vmul.f32 %v585, %v590
    %594 = vrot.lane.b32.xlu0 %v586, 64
    %v595 = vpop.permute.xlu0 %594
    %v597 = vmul.f32 %v585, %v595
    %599 = vrot.lane.b32.xlu0 %v597, 32
    %v600 = vpop.permute.xlu0 %599
    %v602 = vadd.f32 %v592, %v600
    %v603 = vtanh.pop %v602
    %605 = vrot.lane.b32.xlu0 %v603, 64
    %v606 = vpop.permute.xlu0 %605
    %v608 = vmul.f32 %v585, %v606
    %610 = vrot.lane.b32.xlu0 %v602, 96
    %v611 = vpop.permute.xlu0 %610
    %vm613 = vcmask 254976
    %614 = vst.msk [vmem:[#allocation17] sm:$0x3] %vm613, %v611
    %616 = vrot.lane.b32.xlu0 %v608, 32
    %v617 = vpop.permute.xlu0 %616
    %619 = vst.msk [vmem:[#allocation16] sm:$0x3] %vm613, %v617
    %620 = vrot.lane.b32.xlu0 %v608, 64
    %v621 = vpop.permute.xlu0 %620
    %v623 = vsel %vm184, %v511, %v621
    %v624 = vld [vmem:[#allocation13] sm:$0xff]
    %v625 = vld [vmem:[#allocation13 + $0x8] sm:$0xff]
    %v626 = vld [vmem:[#allocation13 + $0x10] sm:$0xff]
    %v627 = vld [vmem:[#allocation13 + $0x18] sm:$0xff]
    %v628 = vld [vmem:[#allocation13 + $0x20] sm:$0xff]
    %v629 = vld [vmem:[#allocation13 + $0x28] sm:$0xff]
    %v630 = vld [vmem:[#allocation13 + $0x30] sm:$0xff]
    %v631 = vld [vmem:[#allocation13 + $0x38] sm:$0xff]
    %v632 = vperm.slane %v173, 0
    %v634 = vsel %vm400, %v623, 0
    %636 = vmatpush.msra.mxu0 0.0
    %637 = vmatpush.msra.mxu0 0.0
    %638 = vmatpush.msra.mxu0 0.0
    %639 = vmatpush.msra.mxu0 0.0
    %640 = vmatpush.msra.mxu0 0.0
    %641 = vmatpush.msra.mxu0 0.0
    %642 = vmatpush.msra.mxu0 0.0
    %643 = vmatpush.msra.mxu0 0.0
    %644 = vmatpush.msra.mxu0 %v631
    %645 = vmatpush.msra.mxu0 %v630
    %646 = vmatpush.msra.mxu0 %v629
    %647 = vmatpush.msra.mxu0 %v628
    %648 = vmatpush.msra.mxu0 %v627
    %649 = vmatpush.msra.mxu0 %v626
    %650 = vmatpush.msra.mxu0 %v625
    %651 = vmatpush.msra.mxu0 %v624
    %652 = vmatmul.f32.gmra.mxu0 %v634
    %v653 = vpop.f32.mrf.mxu0
    %v654 = vadd.f32 %v632, %v653
    %655 = vdwg.mxu0
    %v657 = vrot.slane %v654, 1
    %v658 = vperm.slane %v654, 0
    %v659 = vperm.slane %v657, 0
    %v662 = vmul.f32 %v390, %v658
    %v663 = vmul.f32 %v391, %v659
    %v664 = vsel %vm400, %v662, 0.0
    %665 = vadd.xlane.f32.xlu0 %v664
    %v666 = vpop.xlane.xlu0 %665
    %v667 = vsel %vm400, %v663, 0.0
    %668 = vadd.xlane.f32.xlu0 %v667
    %v669 = vpop.xlane.xlu0 %668
    %v672 = vperm.slane %v666, %v254
    %v673 = vperm.slane %v669, %v254
    %v674 = vsel %vm257, %v673, %v672
    %676 = vst.msk [vmem:[#allocation20] sm:$0x3] %vm260, %v674
    // Predicated region
    $region82: #{coground_forward.1} parent=1 // pred_check
      _
    $region83: #{coground_forward.1} parent=1 // pred_check_branch
      %678 = sbr.rel (0) target = $region85
    $region84: #{coground_forward.1} parent=1 // pred_region
      %680 = vsyncadd [#allocation4], 0
      %s682 = sshll.u32 [#allocation16], 4
      %s683 = int_to_ptr.vmem [resolvable:$true] %s682
      %s684 = sshll.u32 %s12, 4
      %s685 = int_to_ptr.hbm [resolvable:$true] %s684
      %687 = dma.vmem_to_hbm [thread:$0]  %s683, 32, %s685, [#allocation4]
    $region85: #{coground_forward.1} parent=1 // pred_fallthru
      _
    // Predicated region
    $region86: #{coground_forward.1} parent=1 // pred_check
      _
    $region87: #{coground_forward.1} parent=1 // pred_check_branch
      %689 = sbr.rel (0) target = $region89
    $region88: #{coground_forward.1} parent=1 // pred_region
      %691 = vsyncadd [#allocation18], 0
      %s693 = sshll.u32 [#allocation17], 4
      %s694 = int_to_ptr.vmem [resolvable:$true] %s693
      %s695 = sshll.u32 %s13, 4
      %s696 = int_to_ptr.hbm [resolvable:$true] %s695
      %698 = dma.vmem_to_hbm [thread:$0]  %s694, 32, %s696, [#allocation18]
    $region89: #{coground_forward.1} parent=1 // pred_fallthru
      _
    // Predicated region
    $region90: #{coground_forward.1} parent=1 // pred_check
      _
    $region91: #{coground_forward.1} parent=1 // pred_check_branch
      %700 = sbr.rel (0) target = $region93
    $region92: #{coground_forward.1} parent=1 // pred_region
      %702 = vsyncadd [#allocation18], 0
      %s704 = sshll.u32 [#allocation19], 4
      %s705 = int_to_ptr.vmem [resolvable:$true] %s704
      %s706 = sshll.u32 %s14, 4
      %s707 = int_to_ptr.hbm [resolvable:$true] %s706
      %709 = dma.vmem_to_hbm [thread:$0]  %s705, 32, %s707, [#allocation18]
    $region93: #{coground_forward.1} parent=1 // pred_fallthru
      _
    // Predicated region
    $region94: #{coground_forward.1} parent=1 // pred_check
      _
    $region95: #{coground_forward.1} parent=1 // pred_check_branch
      %711 = sbr.rel (0) target = $region97
    $region96: #{coground_forward.1} parent=1 // pred_region
      %713 = vsyncadd [#allocation21], 0
      %s715 = sshll.u32 [#allocation20], 4
      %s716 = int_to_ptr.vmem [resolvable:$true] %s715
      %s717 = sshll.u32 %s15, 4
      %s718 = int_to_ptr.hbm [resolvable:$true] %s717
      %720 = dma.vmem_to_hbm [thread:$0]  %s716, 32, %s718, [#allocation21]
    $region97: #{coground_forward.1} parent=1 // pred_fallthru
      _
    // Predicated region
    $region98: #{coground_forward.1} parent=1 // pred_check
      _
    $region99: #{coground_forward.1} parent=1 // pred_check_branch
      %722 = sbr.rel (0) target = $region101
    $region100: #{coground_forward.1} parent=1 // pred_region
      %724 = vsyncadd [#allocation21], 0
      %s726 = sshll.u32 [#allocation22], 4
      %s727 = int_to_ptr.vmem [resolvable:$true] %s726
      %s728 = sshll.u32 %s16, 4
      %s729 = int_to_ptr.hbm [resolvable:$true] %s728
      %731 = dma.vmem_to_hbm [thread:$0]  %s727, 32, %s729, [#allocation21]
    $region101: #{coground_forward.1} parent=1 // pred_fallthru
      _
    // Predicated region
    $region102: #{coground_forward.1} parent=1 // pred_check
      _
    $region103: #{coground_forward.1} parent=1 // pred_check_branch
      %733 = sbr.rel (0) target = $region105
    $region104: #{coground_forward.1} parent=1 // pred_region
      %735 = dma.done [#allocation4], 32
    $region105: #{coground_forward.1} parent=1 // pred_fallthru
      _
    // Predicated region
    $region106: #{coground_forward.1} parent=1 // pred_check
      _
    $region107: #{coground_forward.1} parent=1 // pred_check_branch
      %737 = sbr.rel (0) target = $region109
    $region108: #{coground_forward.1} parent=1 // pred_region
      %739 = dma.done [#allocation18], 32
    $region109: #{coground_forward.1} parent=1 // pred_fallthru
      _
    // Predicated region
    $region110: #{coground_forward.1} parent=1 // pred_check
      _
    $region111: #{coground_forward.1} parent=1 // pred_check_branch
      %741 = sbr.rel (0) target = $region113
    $region112: #{coground_forward.1} parent=1 // pred_region
      %743 = dma.done [#allocation18], 32
    $region113: #{coground_forward.1} parent=1 // pred_fallthru
      _
    // Predicated region
    $region114: #{coground_forward.1} parent=1 // pred_check
      _
    $region115: #{coground_forward.1} parent=1 // pred_check_branch
      %745 = sbr.rel (0) target = $region117
    $region116: #{coground_forward.1} parent=1 // pred_region
      %747 = dma.done [#allocation21], 32
    $region117: #{coground_forward.1} parent=1 // pred_fallthru
      _
    // Predicated region
    $region118: #{coground_forward.1} parent=1 // pred_check
      _
    $region119: #{coground_forward.1} parent=1 // pred_check_branch
      %749 = sbr.rel (0) target = $region121
    $region120: #{coground_forward.1} parent=1 // pred_region
      %751 = dma.done [#allocation21], 32
    $region121: #{coground_forward.1} parent=1 // pred_fallthru
      _
    %752 = vsyncpa [#allocation3], 1
    %753 = vsyncpa [#allocation6], 1
    %754 = vsyncpa [#allocation9], 1
    %755 = vsyncpa [#allocation12], 1
    %756 = vsyncpa [#allocation15], 1
    %757 = vsyncpa [#allocation4], 1
    %758 = vsyncpa [#allocation18], 1
    %759 = vsyncpa [#allocation21], 1

</llo_original>
